<compile_context>
chip_gen: v7x
topology: tpu7x:2x2x1
jax: 0.10.0
libtpu: 0.0.40
codegen_flags: <defaults>
</compile_context>

<pallas_src>
import functools

import jax
import jax.numpy as jnp
from jax.experimental import pallas as pl
from jax.experimental.pallas import tpu as pltpu


def _round_up(x: int, m: int) -> int:
    return ((x + m - 1) // m) * m


def _matmul_kernel_direct(x_ref, w_ref, o_ref):
    # Full-K resident: single dot per output block, no accumulator round-trip.
    o_ref[...] = jnp.dot(
        x_ref[...], w_ref[...], preferred_element_type=jnp.float32
    ).astype(o_ref.dtype)


def _matmul_kernel_acc(x_ref, w_ref, o_ref, acc_ref):
    # K-reduction grid axis with f32 VMEM accumulator.
    @pl.when(pl.program_id(2) == 0)
    def _():
        acc_ref[...] = jnp.zeros_like(acc_ref)

    acc_ref[...] += jnp.dot(
        x_ref[...], w_ref[...], preferred_element_type=jnp.float32
    )

    @pl.when(pl.program_id(2) == pl.num_programs(2) - 1)
    def _():
        o_ref[...] = acc_ref[...].astype(o_ref.dtype)


def _choose_tiles(M, N, K, itemsize):
    """Pick (tm, tn, tk, use_k_axis) sized against a ~32 MiB tile budget."""
    tm = min(256, _round_up(M, 8))      # large M tiles; small batch -> one block
    tn = min(512, _round_up(N, 128))    # lane-dense output (multiple of 128)
    budget = 32 * 1024 * 1024           # conservative: fits v7x 64 MiB VMEM

    def tiles_bytes(tk, with_acc):
        b = 2 * tm * tk * itemsize      # double-buffered x tile
        b += 2 * tk * tn * itemsize     # double-buffered w tile
        b += 2 * tm * tn * itemsize     # double-buffered out tile
        if with_acc:
            b += tm * tn * 4            # f32 accumulator scratch
        return b

    k_full = _round_up(K, 128)
    if tiles_bytes(k_full, with_acc=False) <= budget:
        # Whole reduction fits in VMEM: no K grid axis, no accumulator.
        return tm, tn, k_full, False

    # Otherwise choose the largest power-of-two-ish tk (multiple of 512) that fits.
    tk = 512
    while tk * 2 < k_full and tiles_bytes(tk * 2, with_acc=True) <= budget:
        tk *= 2
    return tm, tn, tk, True


@functools.partial(jax.jit, static_argnames=("vmem_limit_bytes",))
def centroid_classifier(inputs, weights, *, vmem_limit_bytes=48 * 1024 * 1024):
    """inputs: [M, K], weights: [K, N] -> [M, N]  (same dtype as inputs)."""
    M, K = inputs.shape
    K2, N = weights.shape
    assert K == K2, "feature dims must match"

    out_dtype = inputs.dtype
    itemsize = jnp.dtype(inputs.dtype).itemsize

    tm, tn, tk, use_k_axis = _choose_tiles(M, N, K, itemsize)

    M_pad = _round_up(M, tm)
    N_pad = _round_up(N, tn)
    K_pad = _round_up(K, tk)

    x = inputs
    w = weights
    if (M_pad, K_pad) != (M, K):
        x = jnp.pad(x, ((0, M_pad - M), (0, K_pad - K)))
    if (K_pad, N_pad) != (K, N):
        w = jnp.pad(w, ((0, K_pad - K), (0, N_pad - N)))

    cost = pl.CostEstimate(
        flops=2 * M * N * K,
        transcendentals=0,
        bytes_accessed=(M * K + K * N + M * N) * itemsize,
    )

    if use_k_axis:
        grid = (M_pad // tm, N_pad // tn, K_pad // tk)
        grid_spec = pltpu.PrefetchScalarGridSpec(
            num_scalar_prefetch=0,
            grid=grid,
            in_specs=[
                pl.BlockSpec((tm, tk), lambda i, j, k: (i, k)),
                pl.BlockSpec((tk, tn), lambda i, j, k: (k, j)),
            ],
            out_specs=pl.BlockSpec((tm, tn), lambda i, j, k: (i, j)),
            scratch_shapes=[pltpu.VMEM((tm, tn), jnp.float32)],
        )
        kernel = _matmul_kernel_acc
        dims = ("parallel", "parallel", "arbitrary")
    else:
        grid = (M_pad // tm, N_pad // tn)
        grid_spec = pltpu.PrefetchScalarGridSpec(
            num_scalar_prefetch=0,
            grid=grid,
            in_specs=[
                pl.BlockSpec((tm, K_pad), lambda i, j: (i, 0)),
                pl.BlockSpec((K_pad, tn), lambda i, j: (0, j)),
            ],
            out_specs=pl.BlockSpec((tm, tn), lambda i, j: (i, j)),
            scratch_shapes=[],
        )
        kernel = _matmul_kernel_direct
        dims = ("parallel", "parallel")

    out_pad = pl.pallas_call(
        kernel,
        out_shape=jax.ShapeDtypeStruct((M_pad, N_pad), out_dtype),
        grid_spec=grid_spec,
        compiler_params=pltpu.CompilerParams(
            dimension_semantics=dims,
            vmem_limit_bytes=vmem_limit_bytes,
        ),
        cost_estimate=cost,
    )(x, w)

    if (M_pad, N_pad) != (M, N):
        out_pad = out_pad[:M, :N]
    return out_pad


if __name__ == "__main__":
    # Small, deterministic synthetic setup:
    #   batch=16 feature vectors of dim 256, num_classes=128.
    key = jax.random.PRNGKey(0)
    k_x, k_w = jax.random.split(key)

    batch, feat_dim, num_classes = 16, 256, 128
    x = jax.random.normal(k_x, (batch, feat_dim), dtype=jnp.float32)
    # "Pre-computed centroid weights" — synthetic deterministic stand-in for
    # CentroidClassifier.create_weights output (shape [feat_dim, num_classes]).
    w = jax.random.normal(k_w, (feat_dim, num_classes), dtype=jnp.float32)

    out = centroid_classifier(x, w)
    jax.block_until_ready(out)

    # Correctness check against the reference matmul semantics.
    ref = x @ w
    assert out.shape == (batch, num_classes)
    assert jnp.allclose(out, ref, atol=1e-4, rtol=1e-4)

    # Also exercise a non-tile-aligned shape to validate the padding path.
    xb = jax.random.normal(k_x, (37, 300), dtype=jnp.float32)
    wb = jax.random.normal(k_w, (300, 70), dtype=jnp.float32)
    outb = centroid_classifier(xb, wb)
    jax.block_until_ready(outb)
    assert outb.shape == (37, 70)
    assert jnp.allclose(outb, xb @ wb, atol=1e-4, rtol=1e-4)

    print("KERNEL_OK")
</pallas_src>

<mosaic_0001>
module attributes {stable_mosaic.version = 11 : i64} {
  func.func @_matmul_kernel_direct(%arg0: i32, %arg1: i32, %arg2: memref<16x256xf32, #tpu.memory_space<vmem>>, %arg3: memref<256x128xf32, #tpu.memory_space<vmem>>, %arg4: memref<16x128xf32, #tpu.memory_space<vmem>>) attributes {dimension_semantics = [#tpu.dimension_semantics<parallel>, #tpu.dimension_semantics<parallel>], iteration_bounds = array<i64: 1, 1>, scalar_prefetch = 0 : i64, scratch_operands = 0 : i64, tpu.core_type = #tpu.core_type<tc>, window_params = [{transform_indices = @transform_0, window_bounds = array<i64: 16, 256>}, {transform_indices = @transform_1, window_bounds = array<i64: 256, 128>}, {transform_indices = @transform_2, window_bounds = array<i64: 16, 128>}]} {
    %c0 = arith.constant 0 : index
    %c0_0 = arith.constant 0 : index
    %0 = vector.load %arg2[%c0, %c0_0] : memref<16x256xf32, #tpu.memory_space<vmem>>, vector<16x256xf32>
    %c0_1 = arith.constant 0 : index
    %c0_2 = arith.constant 0 : index
    %1 = vector.load %arg3[%c0_1, %c0_2] : memref<256x128xf32, #tpu.memory_space<vmem>>, vector<256x128xf32>
    %cst = arith.constant dense<0.000000e+00> : vector<16x128xf32>
    %2 = tpu.matmul %0, %1, %cst {dimension_numbers = #tpu.dot_dimension_numbers<[1], [0], [0], [1], [0, 0, 1, 1], [], []>} : vector<16x256xf32>, vector<256x128xf32>, vector<16x128xf32> -> vector<16x128xf32>
    %c0_3 = arith.constant 0 : index
    %c0_4 = arith.constant 0 : index
    %3 = vector.load %arg4[%c0_3, %c0_4] : memref<16x128xf32, #tpu.memory_space<vmem>>, vector<16x128xf32>
    tpu.vector_store %arg4[%c0_3, %c0_4], %2 {strides = array<i32>} : memref<16x128xf32, #tpu.memory_space<vmem>>, vector<16x128xf32>,
    return
  }
  func.func @transform_0(%arg0: i32, %arg1: i32) -> (i32, i32) {
    %c0_i32 = arith.constant 0 : i32
    %c0_i32_0 = arith.constant 0 : i32
    return %arg0, %c0_i32 : i32, i32
  }
  func.func @transform_1(%arg0: i32, %arg1: i32) -> (i32, i32) {
    %c0_i32 = arith.constant 0 : i32
    %c0_i32_0 = arith.constant 0 : i32
    return %c0_i32, %arg1 : i32, i32
  }
  func.func @transform_2(%arg0: i32, %arg1: i32) -> (i32, i32) {
    %c0_i32 = arith.constant 0 : i32
    return %arg0, %arg1 : i32, i32
  }
}

</mosaic_0001>

<llo_original>
// kernel: centroid_classifier.1
$region0: #{centroid_classifier.1}
  #allocation0 [shape = 'u32[]', space=smem, size = 0x4, offset = 0x4, fixed_abs, tag = 'smem constant byte address 0x4 - core index']
  #allocation1 [shape = 'u32[144,128]{1,0:T(1,128)}', space=vmem, size = 0x12000, scoped, tag = 'internal scratch']
  %s0 = inlined_call_operand.hbm [shape: f32[16,256], index: 0, kind: input, shape index: {}]
  %s1 = inlined_call_operand.hbm [shape: f32[256,128], index: 1, kind: input, shape index: {}]
  %s2 = inlined_call_operand.hbm [shape: f32[16,128], index: 2, kind: output, shape index: {}]
  %s3 = sld [smem:[#allocation0]]
  $region26: #{centroid_classifier.1} parent=0
    _
  %s5 = ssub.s32 1, %s3
  %s6 = scalar_select 0, %s5, %s3
  $region1: #{centroid_classifier.1} parent=0
    #allocation2 [shape = 'u8[16384]{0}', space=vmem, size = 0x4000, scoped, tag = 'input window, operand 0, single buffered']
    #allocation3 [shape = 's32[1]{0}', space=sflag, size = 0x4, scoped, tag = 'scoped memory for centroid_classifier.1']
    #allocation4 [shape = 's32[1]{0}', space=sflag, size = 0x4, scoped, tag = 'scoped memory for centroid_classifier.1']
    #allocation5 [shape = 'u8[131072]{0}', space=vmem, size = 0x20000, scoped, tag = 'input window, operand 1, single buffered']
    #allocation6 [shape = 's32[1]{0}', space=sflag, size = 0x4, scoped, tag = 'scoped memory for centroid_classifier.1']
    #allocation7 [shape = 'u8[8192]{0}', space=vmem, size = 0x2000, scoped, tag = 'output window, operand 0, single buffered']
    %7 = vsyncpa [#allocation3], 0
    %8 = vsyncpa [#allocation6], 0
    %9 = vsyncpa [#allocation4], 0
    // Predicated region
    $region2: #{centroid_classifier.1} parent=1 // pred_check
      _
    $region3: #{centroid_classifier.1} parent=1 // pred_check_branch
      %11 = sbr.rel (0) target = $region5
    $region4: #{centroid_classifier.1} parent=1 // pred_region
      %s13 = ssub.s32 512, 512
      %14 = vsyncadd [#allocation3], %s13
      %s15 = sshll.u32 [#allocation2], 4
      %s16 = int_to_ptr.vmem [resolvable:$true] %s15
      %21 = dma.hbm_to_vmem [thread:$0]  %s0, 512, %s16, [#allocation3], 256, 256, 16
    $region5: #{centroid_classifier.1} parent=1 // pred_fallthru
      _
    // Predicated region
    $region6: #{centroid_classifier.1} parent=1 // pred_check
      _
    $region7: #{centroid_classifier.1} parent=1 // pred_check_branch
      %23 = sbr.rel (0) target = $region9
    $region8: #{centroid_classifier.1} parent=1 // pred_region
      %s25 = ssub.s32 4096, 4096
      %26 = vsyncadd [#allocation6], %s25
      %s27 = sshll.u32 [#allocation5], 4
      %s28 = int_to_ptr.vmem [resolvable:$true] %s27
      %33 = dma.hbm_to_vmem [thread:$0]  %s1, 4096, %s28, [#allocation6], 128, 128, 8
    $region9: #{centroid_classifier.1} parent=1 // pred_fallthru
      _
    // Predicated region
    $region10: #{centroid_classifier.1} parent=1 // pred_check
      _
    $region11: #{centroid_classifier.1} parent=1 // pred_check_branch
      %35 = sbr.rel (0) target = $region13
    $region12: #{centroid_classifier.1} parent=1 // pred_region
      %36 = dma.done [#allocation3], 512
    $region13: #{centroid_classifier.1} parent=1 // pred_fallthru
      _
    // Predicated region
    $region14: #{centroid_classifier.1} parent=1 // pred_check
      _
    $region15: #{centroid_classifier.1} parent=1 // pred_check_branch
      %38 = sbr.rel (0) target = $region17
    $region16: #{centroid_classifier.1} parent=1 // pred_region
      %39 = dma.done [#allocation6], 4096
    $region17: #{centroid_classifier.1} parent=1 // pred_fallthru
      _
    %v40 = vld [vmem:[#allocation2] sm:$0xff]
    %v41 = vld [vmem:[#allocation2 + $0x8] sm:$0xff]
    %v42 = vld [vmem:[#allocation2 + $0x10] sm:$0xff]
    %v43 = vld [vmem:[#allocation2 + $0x18] sm:$0xff]
    %v44 = vld [vmem:[#allocation5] sm:$0xff]
    %v45 = vld [vmem:[#allocation5 + $0x8] sm:$0xff]
    %v46 = vld [vmem:[#allocation5 + $0x10] sm:$0xff]
    %v47 = vld [vmem:[#allocation5 + $0x18] sm:$0xff]
    %v48 = vld [vmem:[#allocation5 + $0x20] sm:$0xff]
    %v49 = vld [vmem:[#allocation5 + $0x28] sm:$0xff]
    %v50 = vld [vmem:[#allocation5 + $0x30] sm:$0xff]
    %v51 = vld [vmem:[#allocation5 + $0x38] sm:$0xff]
    %v52 = vld [vmem:[#allocation5 + $0x40] sm:$0xff]
    %v53 = vld [vmem:[#allocation5 + $0x48] sm:$0xff]
    %v54 = vld [vmem:[#allocation5 + $0x50] sm:$0xff]
    %v55 = vld [vmem:[#allocation5 + $0x58] sm:$0xff]
    %v56 = vld [vmem:[#allocation5 + $0x60] sm:$0xff]
    %v57 = vld [vmem:[#allocation5 + $0x68] sm:$0xff]
    %v58 = vld [vmem:[#allocation5 + $0x70] sm:$0xff]
    %v59 = vld [vmem:[#allocation5 + $0x78] sm:$0xff]
    %v60 = vld [vmem:[#allocation5 + $0x80] sm:$0xff]
    %v61 = vld [vmem:[#allocation5 + $0x88] sm:$0xff]
    %v62 = vld [vmem:[#allocation5 + $0x90] sm:$0xff]
    %v63 = vld [vmem:[#allocation5 + $0x98] sm:$0xff]
    %v64 = vld [vmem:[#allocation5 + $0xa0] sm:$0xff]
    %v65 = vld [vmem:[#allocation5 + $0xa8] sm:$0xff]
    %v66 = vld [vmem:[#allocation5 + $0xb0] sm:$0xff]
    %v67 = vld [vmem:[#allocation5 + $0xb8] sm:$0xff]
    %v68 = vld [vmem:[#allocation5 + $0xc0] sm:$0xff]
    %v69 = vld [vmem:[#allocation5 + $0xc8] sm:$0xff]
    %v70 = vld [vmem:[#allocation5 + $0xd0] sm:$0xff]
    %v71 = vld [vmem:[#allocation5 + $0xd8] sm:$0xff]
    %v72 = vld [vmem:[#allocation5 + $0xe0] sm:$0xff]
    %v73 = vld [vmem:[#allocation5 + $0xe8] sm:$0xff]
    %v74 = vld [vmem:[#allocation5 + $0xf0] sm:$0xff]
    %v75 = vld [vmem:[#allocation5 + $0xf8] sm:$0xff]
    %76 = vmatprep.subr.mxu0 0.0
    %77 = vmatpush1.msra.mxu0 %v44
    %78 = vmatprep.subr.mxu0 0.0
    %79 = vmatpush1.msra.mxu0 %v45
    %80 = vmatprep.subr.mxu0 0.0
    %81 = vmatpush1.msra.mxu0 %v46
    %82 = vmatprep.subr.mxu0 0.0
    %83 = vmatpush1.msra.mxu0 %v47
    %84 = vmatprep.subr.mxu0 0.0
    %85 = vmatpush1.msra.mxu0 %v48
    %86 = vmatprep.subr.mxu0 0.0
    %87 = vmatpush1.msra.mxu0 %v49
    %88 = vmatprep.subr.mxu0 0.0
    %89 = vmatpush1.msra.mxu0 %v50
    %90 = vmatprep.subr.mxu0 0.0
    %91 = vmatpush1.msra.mxu0 %v51
    %92 = vmatprep.subr.mxu0 0.0
    %93 = vmatpush1.msra.mxu0 %v52
    %94 = vmatprep.subr.mxu0 0.0
    %95 = vmatpush1.msra.mxu0 %v53
    %96 = vmatprep.subr.mxu0 0.0
    %97 = vmatpush1.msra.mxu0 %v54
    %98 = vmatprep.subr.mxu0 0.0
    %99 = vmatpush1.msra.mxu0 %v55
    %100 = vmatprep.subr.mxu0 0.0
    %101 = vmatpush1.msra.mxu0 %v56
    %102 = vmatprep.subr.mxu0 0.0
    %103 = vmatpush1.msra.mxu0 %v57
    %104 = vmatprep.subr.mxu0 0.0
    %105 = vmatpush1.msra.mxu0 %v58
    %106 = vmatprep.subr.mxu0 0.0
    %107 = vmatpush1.msra.mxu0 %v59
    %108 = vmatprep.subr.mxu0 0.0
    %109 = vmatpush1.msra.mxu0 %v60
    %110 = vmatprep.subr.mxu0 0.0
    %111 = vmatpush1.msra.mxu0 %v61
    %112 = vmatprep.subr.mxu0 0.0
    %113 = vmatpush1.msra.mxu0 %v62
    %114 = vmatprep.subr.mxu0 0.0
    %115 = vmatpush1.msra.mxu0 %v63
    %116 = vmatprep.subr.mxu0 0.0
    %117 = vmatpush1.msra.mxu0 %v64
    %118 = vmatprep.subr.mxu0 0.0
    %119 = vmatpush1.msra.mxu0 %v65
    %120 = vmatprep.subr.mxu0 0.0
    %121 = vmatpush1.msra.mxu0 %v66
    %122 = vmatprep.subr.mxu0 0.0
    %123 = vmatpush1.msra.mxu0 %v67
    %124 = vmatprep.subr.mxu0 0.0
    %125 = vmatpush1.msra.mxu0 %v68
    %126 = vmatprep.subr.mxu0 0.0
    %127 = vmatpush1.msra.mxu0 %v69
    %128 = vmatprep.subr.mxu0 0.0
    %129 = vmatpush1.msra.mxu0 %v70
    %130 = vmatprep.subr.mxu0 0.0
    %131 = vmatpush1.msra.mxu0 %v71
    %132 = vmatprep.subr.mxu0 0.0
    %133 = vmatpush1.msra.mxu0 %v72
    %134 = vmatprep.subr.mxu0 0.0
    %135 = vmatpush1.msra.mxu0 %v73
    %136 = vmatprep.subr.mxu0 0.0
    %137 = vmatpush1.msra.mxu0 %v74
    %138 = vmatprep.subr.mxu0 0.0
    %139 = vmatpush1.msra.mxu0 %v75
    %140 = vmatprep.mubr.f32.mxu0 %v41
    %141 = vmatmul.mubr.f32.gmra.mrb[0].mxu0 %v40
    %v142 = vpop.f32.mrb[0].mxu0
    %v143 = vadd.f32 0.0, %v142
    %v144 = vpop.f32.mrb[0].mxu0
    %145 = vmatprep.mubr.f32.mxu0 %v43
    %146 = vmatmul.mubr.f32.gmra.mrb[0].mxu0 %v42
    %v147 = vpop.f32.mrb[0].mxu0
    %v148 = vadd.f32 0.0, %v147
    %v149 = vpop.f32.mrb[0].mxu0
    %150 = vdwg.mxu0
    %151 = vst [vmem:[#allocation7] sm:$0xff] %v143
    %152 = vst [vmem:[#allocation7 + $0x8] sm:$0xff] %v148
    // Predicated region
    $region18: #{centroid_classifier.1} parent=1 // pred_check
      _
    $region19: #{centroid_classifier.1} parent=1 // pred_check_branch
      %154 = sbr.rel (0) target = $region21
    $region20: #{centroid_classifier.1} parent=1 // pred_region
      %s156 = ssub.s32 256, 256
      %157 = vsyncadd [#allocation4], %s156
      %s158 = sshll.u32 [#allocation7], 4
      %s159 = int_to_ptr.vmem [resolvable:$true] %s158
      %164 = dma.vmem_to_hbm [thread:$0]  %s159, 256, %s2, [#allocation4], 128, 128, 8
    $region21: #{centroid_classifier.1} parent=1 // pred_fallthru
      _
    // Predicated region
    $region22: #{centroid_classifier.1} parent=1 // pred_check
      _
    $region23: #{centroid_classifier.1} parent=1 // pred_check_branch
      %166 = sbr.rel (0) target = $region25
    $region24: #{centroid_classifier.1} parent=1 // pred_region
      %167 = dma.done [#allocation4], 256
    $region25: #{centroid_classifier.1} parent=1 // pred_fallthru
      _
    %168 = vsyncpa [#allocation3], 1
    %169 = vsyncpa [#allocation6], 1
    %170 = vsyncpa [#allocation4], 1

</llo_original>
